<compile_context>
chip_gen: v7x
topology: tpu7x:2x2x1
jax: 0.10.0
libtpu: 0.0.40
codegen_flags: <defaults>
</compile_context>

<pallas_src>
import functools

import jax
import jax.numpy as jnp
from jax.experimental import pallas as pl
from jax.experimental.pallas import tpu as pltpu


_MAX_TILE_N = 4096  # lane-axis tile cap; only relevant for very large batches


def _round_up(x: int, m: int) -> int:
    return -(-x // m) * m


def _mlp_kernel(x_ref, w1_ref, b1_ref, w2_ref, b2_ref, w3_ref, b3_ref, o_ref):
    """Fused 3-layer MLP in transposed (feature, batch) layout.

    x_ref : (Cin, tile_n)    f32
    w1_ref: (H, Cin)         f32   (PyTorch-native (out, in))
    b1_ref: (H, 1)           f32
    w2_ref: (H, H)           f32
    b2_ref: (H, 1)           f32
    w3_ref: (Cout_pad, H)    f32   (padded to 8 sublanes)
    b3_ref: (Cout_pad, 1)    f32
    o_ref : (Cout_pad, tile_n) f32
    """
    x = x_ref[...]

    h1 = jnp.dot(w1_ref[...], x, preferred_element_type=jnp.float32) + b1_ref[...]
    h1 = jnp.maximum(h1, 0.0)

    h2 = jnp.dot(w2_ref[...], h1, preferred_element_type=jnp.float32) + b2_ref[...]
    h2 = jnp.maximum(h2, 0.0)

    out = jnp.dot(w3_ref[...], h2, preferred_element_type=jnp.float32) + b3_ref[...]
    o_ref[...] = out.astype(o_ref.dtype)  # lane-dense (Cout_pad, tile_n) store


def pack_params(w1, b1, w2, b2, w3, b3):
    """One-time packing of PyTorch-layout params for the kernel.

    Inputs use PyTorch Linear layout: w_k is (out, in), b_k is (out,).
    Returns f32 params with biases as (out, 1) and W3/b3 padded to 8 sublanes.
    """
    H = w1.shape[0]
    Cout = w3.shape[0]
    Cout_pad = _round_up(max(Cout, 8), 8)

    w1p = w1.astype(jnp.float32)                               # (H, Cin)
    w2p = w2.astype(jnp.float32)                               # (H, H)
    w3p = jnp.zeros((Cout_pad, H), jnp.float32).at[:Cout, :].set(
        w3.astype(jnp.float32))
    b1p = b1.reshape(H, 1).astype(jnp.float32)
    b2p = b2.reshape(H, 1).astype(jnp.float32)
    b3p = jnp.zeros((Cout_pad, 1), jnp.float32).at[:Cout, :].set(
        b3.reshape(Cout, 1).astype(jnp.float32))
    return (w1p, b1p, w2p, b2p, w3p, b3p)


@functools.partial(jax.jit, static_argnames=("out_channels",))
def discriminator_forward(x, packed_params, *, out_channels):
    """x: (N, Cin) f32 -> (N, out_channels) f32."""
    w1, b1, w2, b2, w3p, b3p = packed_params
    N, Cin = x.shape
    H = w1.shape[0]
    Cout_pad = w3p.shape[0]

    # --- lane-axis tiling: one grid step for typical N ----------------------
    # The whole working set (weights ~5 KiB, x (Cin,N) f32, out (8,N) f32) is
    # tiny, so a single grid step avoids all pipeline prologue/epilogue cost.
    # Only for very large N do we tile along the lane (batch) axis.
    N_pad = _round_up(N, 128)
    tile_n = min(N_pad, _MAX_TILE_N)
    N_pad = _round_up(N_pad, tile_n)
    grid_steps = N_pad // tile_n

    # --- layout plumbing: batch on lanes, zero-pad to the tile multiple -----
    if N_pad == N:
        xt = x.T                                              # (Cin, N)
    else:
        xt = jnp.zeros((Cin, N_pad), x.dtype).at[:, :N].set(x.T)

    # Resident (constant index_map) params: single-buffer them when the grid
    # actually has multiple steps; with grid=(1,) default buffering is moot.
    if grid_steps > 1:
        def const_spec(shape):
            return pl.BlockSpec(shape, lambda i: (0, 0),
                                pipeline_mode=pl.Buffered(1))
    else:
        def const_spec(shape):
            return pl.BlockSpec(shape, lambda i: (0, 0))

    in_specs = [
        pl.BlockSpec((Cin, tile_n), lambda i: (0, i)),        # x tile
        const_spec((H, Cin)),                                 # W1
        const_spec((H, 1)),                                   # b1
        const_spec((H, H)),                                   # W2
        const_spec((H, 1)),                                   # b2
        const_spec((Cout_pad, H)),                            # W3 (padded)
        const_spec((Cout_pad, 1)),                            # b3 (padded)
    ]
    out_specs = pl.BlockSpec((Cout_pad, tile_n), lambda i: (0, i))

    # Advisory cost hint for XLA's scheduler around the custom call.
    flops = 2 * N * (Cin * H + H * H + H * out_channels)
    bytes_accessed = (
        N_pad * Cin * 4                                       # x
        + (Cin * H + H * H + Cout_pad * H) * 4                # weights
        + (2 * H + Cout_pad) * 4                              # biases
        + N_pad * Cout_pad * 4                                # output
    )

    out_pad = pl.pallas_call(
        _mlp_kernel,
        out_shape=jax.ShapeDtypeStruct((Cout_pad, N_pad), jnp.float32),
        grid_spec=pltpu.PrefetchScalarGridSpec(
            num_scalar_prefetch=0,
            grid=(grid_steps,),
            in_specs=in_specs,
            out_specs=out_specs,
        ),
        compiler_params=pltpu.CompilerParams(
            dimension_semantics=("parallel",),
        ),
        cost_estimate=pl.CostEstimate(
            flops=flops, transcendentals=0, bytes_accessed=bytes_accessed),
    )(xt, w1, b1, w2, b2, w3p, b3p)

    # Padded rows/cols are bias-only junk; downstream code that can consume the
    # (Cout_pad, N_pad) slab directly may skip this slice + transpose.
    return out_pad[:out_channels, :N].T


def init_params(key, in_channels, hidden_channels, out_channels):
    """Deterministic synthetic init, PyTorch Linear layout ((out,in) W, (out,) b)."""
    ks = jax.random.split(key, 6)

    def lin(kw, kb, fan_in, fan_out):
        bound = 1.0 / jnp.sqrt(fan_in)
        w = jax.random.uniform(kw, (fan_out, fan_in), jnp.float32, -bound, bound)
        b = jax.random.uniform(kb, (fan_out,), jnp.float32, -bound, bound)
        return w, b

    w1, b1 = lin(ks[0], ks[1], in_channels, hidden_channels)
    w2, b2 = lin(ks[2], ks[3], hidden_channels, hidden_channels)
    w3, b3 = lin(ks[4], ks[5], hidden_channels, out_channels)
    return w1, b1, w2, b2, w3, b3


def reference_forward(x, w1, b1, w2, b2, w3, b3):
    """Pure-JAX f32 reference matching the PyTorch module exactly."""
    hp = jax.lax.Precision.HIGHEST
    h1 = jax.nn.relu(jnp.dot(x, w1.T, precision=hp) + b1)
    h2 = jax.nn.relu(jnp.dot(h1, w2.T, precision=hp) + b2)
    return jnp.dot(h2, w3.T, precision=hp) + b3


if __name__ == "__main__":
    in_channels, hidden_channels, out_channels = 4, 32, 2
    N = 256  # batch / number of nodes

    key = jax.random.PRNGKey(0)
    kx, kp = jax.random.split(key)
    x = jax.random.normal(kx, (N, in_channels), jnp.float32)
    torch_params = init_params(kp, in_channels, hidden_channels, out_channels)

    packed = pack_params(*torch_params)   # one-time packing, outside forward

    out = discriminator_forward(x, packed, out_channels=out_channels)
    out = jax.block_until_ready(out)

    assert out.shape == (N, out_channels)

    ref = reference_forward(x, *torch_params)
    max_err = jnp.max(jnp.abs(out - ref))
    assert jnp.allclose(out, ref, atol=1e-3, rtol=1e-3), (
        f"mismatch vs f32 reference, max abs err {max_err}")

    print("KERNEL_OK")
</pallas_src>

<mosaic_0001>
module attributes {stable_mosaic.version = 11 : i64} {
  func.func @_mlp_kernel(%arg0: i32, %arg1: memref<4x256xf32, #tpu.memory_space<vmem>>, %arg2: memref<32x4xf32, #tpu.memory_space<vmem>>, %arg3: memref<32x1xf32, #tpu.memory_space<vmem>>, %arg4: memref<32x32xf32, #tpu.memory_space<vmem>>, %arg5: memref<32x1xf32, #tpu.memory_space<vmem>>, %arg6: memref<8x32xf32, #tpu.memory_space<vmem>>, %arg7: memref<8x1xf32, #tpu.memory_space<vmem>>, %arg8: memref<8x256xf32, #tpu.memory_space<vmem>>) attributes {dimension_semantics = [#tpu.dimension_semantics<parallel>], iteration_bounds = array<i64: 1>, scalar_prefetch = 0 : i64, scratch_operands = 0 : i64, tpu.core_type = #tpu.core_type<tc>, window_params = [{transform_indices = @transform_0, window_bounds = array<i64: 4, 256>}, {pipeline_mode = #tpu.pipeline_mode<synchronous>, transform_indices = @transform_1, window_bounds = array<i64: 32, 4>}, {pipeline_mode = #tpu.pipeline_mode<synchronous>, transform_indices = @transform_2, window_bounds = array<i64: 32, 1>}, {pipeline_mode = #tpu.pipeline_mode<synchronous>, transform_indices = @transform_3, window_bounds = array<i64: 32, 32>}, {pipeline_mode = #tpu.pipeline_mode<synchronous>, transform_indices = @transform_4, window_bounds = array<i64: 32, 1>}, {pipeline_mode = #tpu.pipeline_mode<synchronous>, transform_indices = @transform_5, window_bounds = array<i64: 8, 32>}, {pipeline_mode = #tpu.pipeline_mode<synchronous>, transform_indices = @transform_6, window_bounds = array<i64: 8, 1>}, {transform_indices = @transform_7, window_bounds = array<i64: 8, 256>}]} {
    %c0 = arith.constant 0 : index
    %c0_0 = arith.constant 0 : index
    %0 = vector.load %arg1[%c0, %c0_0] : memref<4x256xf32, #tpu.memory_space<vmem>>, vector<4x256xf32>
    %c0_1 = arith.constant 0 : index
    %c0_2 = arith.constant 0 : index
    %1 = vector.load %arg2[%c0_1, %c0_2] : memref<32x4xf32, #tpu.memory_space<vmem>>, vector<32x4xf32>
    %cst = arith.constant dense<0.000000e+00> : vector<32x256xf32>
    %2 = tpu.matmul %1, %0, %cst {dimension_numbers = #tpu.dot_dimension_numbers<[1], [0], [0], [1], [0, 0, 1, 1], [], []>} : vector<32x4xf32>, vector<4x256xf32>, vector<32x256xf32> -> vector<32x256xf32>
    %c0_3 = arith.constant 0 : index
    %c0_4 = arith.constant 0 : index
    %3 = vector.load %arg3[%c0_3, %c0_4] : memref<32x1xf32, #tpu.memory_space<vmem>>, vector<32x1xf32>
    %4 = vector.broadcast %3 : vector<32x1xf32> to vector<32x256xf32>
    %5 = arith.addf %2, %4 : vector<32x256xf32>
    %cst_5 = arith.constant 0.000000e+00 : f32
    %6 = vector.broadcast %cst_5 : f32 to vector<32x256xf32>
    %7 = arith.maximumf %5, %6 : vector<32x256xf32>
    %c0_6 = arith.constant 0 : index
    %c0_7 = arith.constant 0 : index
    %8 = vector.load %arg4[%c0_6, %c0_7] : memref<32x32xf32, #tpu.memory_space<vmem>>, vector<32x32xf32>
    %cst_8 = arith.constant dense<0.000000e+00> : vector<32x256xf32>
    %9 = tpu.matmul %8, %7, %cst_8 {dimension_numbers = #tpu.dot_dimension_numbers<[1], [0], [0], [1], [0, 0, 1, 1], [], []>} : vector<32x32xf32>, vector<32x256xf32>, vector<32x256xf32> -> vector<32x256xf32>
    %c0_9 = arith.constant 0 : index
    %c0_10 = arith.constant 0 : index
    %10 = vector.load %arg5[%c0_9, %c0_10] : memref<32x1xf32, #tpu.memory_space<vmem>>, vector<32x1xf32>
    %11 = vector.broadcast %10 : vector<32x1xf32> to vector<32x256xf32>
    %12 = arith.addf %9, %11 : vector<32x256xf32>
    %cst_11 = arith.constant 0.000000e+00 : f32
    %13 = vector.broadcast %cst_11 : f32 to vector<32x256xf32>
    %14 = arith.maximumf %12, %13 : vector<32x256xf32>
    %c0_12 = arith.constant 0 : index
    %c0_13 = arith.constant 0 : index
    %15 = vector.load %arg6[%c0_12, %c0_13] : memref<8x32xf32, #tpu.memory_space<vmem>>, vector<8x32xf32>
    %cst_14 = arith.constant dense<0.000000e+00> : vector<8x256xf32>
    %16 = tpu.matmul %15, %14, %cst_14 {dimension_numbers = #tpu.dot_dimension_numbers<[1], [0], [0], [1], [0, 0, 1, 1], [], []>} : vector<8x32xf32>, vector<32x256xf32>, vector<8x256xf32> -> vector<8x256xf32>
    %c0_15 = arith.constant 0 : index
    %c0_16 = arith.constant 0 : index
    %17 = vector.load %arg7[%c0_15, %c0_16] : memref<8x1xf32, #tpu.memory_space<vmem>>, vector<8x1xf32>
    %18 = vector.broadcast %17 : vector<8x1xf32> to vector<8x256xf32>
    %19 = arith.addf %16, %18 : vector<8x256xf32>
    %c0_17 = arith.constant 0 : index
    %c0_18 = arith.constant 0 : index
    %20 = vector.load %arg8[%c0_17, %c0_18] : memref<8x256xf32, #tpu.memory_space<vmem>>, vector<8x256xf32>
    tpu.vector_store %arg8[%c0_17, %c0_18], %19 {strides = array<i32>} : memref<8x256xf32, #tpu.memory_space<vmem>>, vector<8x256xf32>,
    return
  }
  func.func @transform_0(%arg0: i32) -> (i32, i32) {
    %c0_i32 = arith.constant 0 : i32
    %c0_i32_0 = arith.constant 0 : i32
    return %c0_i32, %arg0 : i32, i32
  }
  func.func @transform_1(%arg0: i32) -> (i32, i32) {
    %c0_i32 = arith.constant 0 : i32
    %c0_i32_0 = arith.constant 0 : i32
    %c0_i32_1 = arith.constant 0 : i32
    return %c0_i32, %c0_i32_0 : i32, i32
  }
  func.func @transform_2(%arg0: i32) -> (i32, i32) {
    %c0_i32 = arith.constant 0 : i32
    %c0_i32_0 = arith.constant 0 : i32
    %c0_i32_1 = arith.constant 0 : i32
    return %c0_i32, %c0_i32_0 : i32, i32
  }
  func.func @transform_3(%arg0: i32) -> (i32, i32) {
    %c0_i32 = arith.constant 0 : i32
    %c0_i32_0 = arith.constant 0 : i32
    %c0_i32_1 = arith.constant 0 : i32
    return %c0_i32, %c0_i32_0 : i32, i32
  }
  func.func @transform_4(%arg0: i32) -> (i32, i32) {
    %c0_i32 = arith.constant 0 : i32
    %c0_i32_0 = arith.constant 0 : i32
    %c0_i32_1 = arith.constant 0 : i32
    return %c0_i32, %c0_i32_0 : i32, i32
  }
  func.func @transform_5(%arg0: i32) -> (i32, i32) {
    %c0_i32 = arith.constant 0 : i32
    %c0_i32_0 = arith.constant 0 : i32
    %c0_i32_1 = arith.constant 0 : i32
    return %c0_i32, %c0_i32_0 : i32, i32
  }
  func.func @transform_6(%arg0: i32) -> (i32, i32) {
    %c0_i32 = arith.constant 0 : i32
    %c0_i32_0 = arith.constant 0 : i32
    %c0_i32_1 = arith.constant 0 : i32
    return %c0_i32, %c0_i32_0 : i32, i32
  }
  func.func @transform_7(%arg0: i32) -> (i32, i32) {
    %c0_i32 = arith.constant 0 : i32
    %c0_i32_0 = arith.constant 0 : i32
    return %c0_i32, %arg0 : i32, i32
  }
}

</mosaic_0001>

<llo_original>
// kernel: discriminator_forward.1
$region0: #{discriminator_forward.1}
  #allocation0 [shape = 'u32[]', space=smem, size = 0x4, offset = 0x4, fixed_abs, tag = 'smem constant byte address 0x4 - core index']
  #allocation1 [shape = 'u32[144,128]{1,0:T(1,128)}', space=vmem, size = 0x12000, scoped, tag = 'internal scratch']
  %s0 = inlined_call_operand.vmem [shape: f32[4,256], index: 0, kind: input, shape index: {}]
  %s1 = inlined_call_operand.vmem [shape: f32[32,4], index: 1, kind: input, shape index: {}]
  %s2 = inlined_call_operand.vmem [shape: f32[32,1], index: 2, kind: input, shape index: {}]
  %s3 = inlined_call_operand.vmem [shape: f32[32,32], index: 3, kind: input, shape index: {}]
  %s4 = inlined_call_operand.vmem [shape: f32[32,1], index: 4, kind: input, shape index: {}]
  %s5 = inlined_call_operand.vmem [shape: f32[8,32], index: 5, kind: input, shape index: {}]
  %s6 = inlined_call_operand.vmem [shape: f32[8,1], index: 6, kind: input, shape index: {}]
  %s7 = inlined_call_operand.vmem [shape: f32[8,256], index: 7, kind: output, shape index: {}]
  %s8 = sld [smem:[#allocation0]]
  $region38: #{discriminator_forward.1} parent=0
    _
  %s10 = ssub.s32 1, %s8
  %s11 = scalar_select 0, %s10, %s8
  // Predicated region
  $region2: #{discriminator_forward.1} parent=0 // pred_check
    _
  $region3: #{discriminator_forward.1} parent=0 // pred_check_branch
    %13 = sbr.rel (0) target = $region5
  $region4: #{discriminator_forward.1} parent=0 // pred_region
    _
  $region5: #{discriminator_forward.1} parent=0 // pred_fallthru
    _
  // Predicated region
  $region6: #{discriminator_forward.1} parent=0 // pred_check
    _
  $region7: #{discriminator_forward.1} parent=0 // pred_check_branch
    %15 = sbr.rel (0) target = $region9
  $region8: #{discriminator_forward.1} parent=0 // pred_region
    _
  $region9: #{discriminator_forward.1} parent=0 // pred_fallthru
    _
  // Predicated region
  $region10: #{discriminator_forward.1} parent=0 // pred_check
    _
  $region11: #{discriminator_forward.1} parent=0 // pred_check_branch
    %17 = sbr.rel (0) target = $region13
  $region12: #{discriminator_forward.1} parent=0 // pred_region
    _
  $region13: #{discriminator_forward.1} parent=0 // pred_fallthru
    _
  // Predicated region
  $region14: #{discriminator_forward.1} parent=0 // pred_check
    _
  $region15: #{discriminator_forward.1} parent=0 // pred_check_branch
    %19 = sbr.rel (0) target = $region17
  $region16: #{discriminator_forward.1} parent=0 // pred_region
    _
  $region17: #{discriminator_forward.1} parent=0 // pred_fallthru
    _
  // Predicated region
  $region18: #{discriminator_forward.1} parent=0 // pred_check
    _
  $region19: #{discriminator_forward.1} parent=0 // pred_check_branch
    %21 = sbr.rel (0) target = $region21
  $region20: #{discriminator_forward.1} parent=0 // pred_region
    _
  $region21: #{discriminator_forward.1} parent=0 // pred_fallthru
    _
  // Predicated region
  $region22: #{discriminator_forward.1} parent=0 // pred_check
    _
  $region23: #{discriminator_forward.1} parent=0 // pred_check_branch
    %23 = sbr.rel (0) target = $region25
  $region24: #{discriminator_forward.1} parent=0 // pred_region
    _
  $region25: #{discriminator_forward.1} parent=0 // pred_fallthru
    _
  // Predicated region
  $region26: #{discriminator_forward.1} parent=0 // pred_check
    _
  $region27: #{discriminator_forward.1} parent=0 // pred_check_branch
    %25 = sbr.rel (0) target = $region29
  $region28: #{discriminator_forward.1} parent=0 // pred_region
    _
  $region29: #{discriminator_forward.1} parent=0 // pred_fallthru
    _
  %v26 = vld [vmem:[%s0] sm:$0xff]
  %v27 = vld [vmem:[%s1] sm:$0xff]
  %v28 = vld [vmem:[%s1 + $0x8] sm:$0xff]
  %v29 = vld [vmem:[%s1 + $0x10] sm:$0xff]
  %v30 = vld [vmem:[%s1 + $0x18] sm:$0xff]
  %v31 = vld [vmem:[%s2] sm:$0xff]
  %v32 = vld [vmem:[%s2 + $0x8] sm:$0xff]
  %v33 = vld [vmem:[%s2 + $0x10] sm:$0xff]
  %v34 = vld [vmem:[%s2 + $0x18] sm:$0xff]
  %36 = vset.pattern.permute.xlu0 0
  %37 = vperm.xlu0 %36, %v31
  %v38 = vpop.permute.xlu0 %37
  %41 = vset.pattern.permute.xlu0 0
  %42 = vperm.xlu0 %41, %v32
  %v43 = vpop.permute.xlu0 %42
  %46 = vset.pattern.permute.xlu0 0
  %47 = vperm.xlu0 %46, %v33
  %v48 = vpop.permute.xlu0 %47
  %51 = vset.pattern.permute.xlu0 0
  %52 = vperm.xlu0 %51, %v34
  %v53 = vpop.permute.xlu0 %52
  %v56 = vcombine.high %v26, %v26
  %vm57 = vcmask 31744
  %v59 = vsel %vm57, %v27, 0
  %v62 = vsel %vm57, %v28, 0
  %v65 = vsel %vm57, %v29, 0
  %v68 = vsel %vm57, %v30, 0
  %vm70 = vcmask 1043456
  %v71 = vsel %vm70, %v26, 0
  %v73 = vsel %vm70, %v56, 0
  %75 = vmatprep.subr.mxu0 %v73
  %76 = vmatpush1.msra.mxu0 %v71
  %77 = vmatprep.subr.mxu0 0.0
  %78 = vmatpush1.msra.mxu0 0.0
  %79 = vmatprep.subr.mxu0 0.0
  %80 = vmatpush1.msra.mxu0 0.0
  %81 = vmatprep.subr.mxu0 0.0
  %82 = vmatpush1.msra.mxu0 0.0
  %83 = vmatprep.subr.mxu0 0.0
  %84 = vmatpush1.msra.mxu0 0.0
  %85 = vmatprep.subr.mxu0 0.0
  %86 = vmatpush1.msra.mxu0 0.0
  %87 = vmatprep.subr.mxu0 0.0
  %88 = vmatpush1.msra.mxu0 0.0
  %89 = vmatprep.subr.mxu0 0.0
  %90 = vmatpush1.msra.mxu0 0.0
  %91 = vmatprep.subr.mxu0 0.0
  %92 = vmatpush1.msra.mxu0 0.0
  %93 = vmatprep.subr.mxu0 0.0
  %94 = vmatpush1.msra.mxu0 0.0
  %95 = vmatprep.subr.mxu0 0.0
  %96 = vmatpush1.msra.mxu0 0.0
  %97 = vmatprep.subr.mxu0 0.0
  %98 = vmatpush1.msra.mxu0 0.0
  %99 = vmatprep.subr.mxu0 0.0
  %100 = vmatpush1.msra.mxu0 0.0
  %101 = vmatprep.subr.mxu0 0.0
  %102 = vmatpush1.msra.mxu0 0.0
  %103 = vmatprep.subr.mxu0 0.0
  %104 = vmatpush1.msra.mxu0 0.0
  %105 = vmatprep.subr.mxu0 0.0
  %106 = vmatpush1.msra.mxu0 0.0
  %107 = vmatprep.subr.mxu0 0.0
  %108 = vmatpush1.msra.mxu0 0.0
  %109 = vmatprep.subr.mxu0 0.0
  %110 = vmatpush1.msra.mxu0 0.0
  %111 = vmatprep.subr.mxu0 0.0
  %112 = vmatpush1.msra.mxu0 0.0
  %113 = vmatprep.subr.mxu0 0.0
  %114 = vmatpush1.msra.mxu0 0.0
  %115 = vmatprep.subr.mxu0 0.0
  %116 = vmatpush1.msra.mxu0 0.0
  %117 = vmatprep.subr.mxu0 0.0
  %118 = vmatpush1.msra.mxu0 0.0
  %119 = vmatprep.subr.mxu0 0.0
  %120 = vmatpush1.msra.mxu0 0.0
  %121 = vmatprep.subr.mxu0 0.0
  %122 = vmatpush1.msra.mxu0 0.0
  %123 = vmatprep.subr.mxu0 0.0
  %124 = vmatpush1.msra.mxu0 0.0
  %125 = vmatprep.subr.mxu0 0.0
  %126 = vmatpush1.msra.mxu0 0.0
  %127 = vmatprep.subr.mxu0 0.0
  %128 = vmatpush1.msra.mxu0 0.0
  %129 = vmatprep.subr.mxu0 0.0
  %130 = vmatpush1.msra.mxu0 0.0
  %131 = vmatprep.subr.mxu0 0.0
  %132 = vmatpush1.msra.mxu0 0.0
  %133 = vmatprep.subr.mxu0 0.0
  %134 = vmatpush1.msra.mxu0 0.0
  %135 = vmatprep.subr.mxu0 0.0
  %136 = vmatpush1.msra.mxu0 0.0
  %137 = vmatprep.subr.mxu0 0.0
  %138 = vmatpush1.msra.mxu0 0.0
  %139 = vmatprep.mubr.f32.mxu0 0.0
  %140 = vmatmul.mubr.f32.gmra.mrb[0].mxu0 %v59
  %v141 = vpop.f32.mrb[0].mxu0
  %v142 = vadd.f32 %v38, %v141
  %v143 = vpop.f32.mrb[0].mxu0
  %v144 = vadd.f32 %v38, %v143
  %145 = vmatprep.mubr.f32.mxu0 0.0
  %146 = vmatmul.mubr.f32.gmra.mrb[0].mxu0 %v62
  %v147 = vpop.f32.mrb[0].mxu0
  %v148 = vadd.f32 %v43, %v147
  %v149 = vpop.f32.mrb[0].mxu0
  %v150 = vadd.f32 %v43, %v149
  %151 = vmatprep.mubr.f32.mxu0 0.0
  %152 = vmatmul.mubr.f32.gmra.mrb[0].mxu0 %v65
  %v153 = vpop.f32.mrb[0].mxu0
  %v154 = vadd.f32 %v48, %v153
  %v155 = vpop.f32.mrb[0].mxu0
  %v156 = vadd.f32 %v48, %v155
  %157 = vmatprep.mubr.f32.mxu0 0.0
  %158 = vmatmul.mubr.f32.gmra.mrb[0].mxu0 %v68
  %v159 = vpop.f32.mrb[0].mxu0
  %v160 = vadd.f32 %v53, %v159
  %v161 = vpop.f32.mrb[0].mxu0
  %v162 = vadd.f32 %v53, %v161
  %163 = vdwg.mxu0
  %v164 = vmax.f32 %v142, 0.0
  %v165 = vmax.f32 %v144, 0.0
  %v166 = vmax.f32 %v148, 0.0
  %v167 = vmax.f32 %v150, 0.0
  %v168 = vmax.f32 %v154, 0.0
  %v169 = vmax.f32 %v156, 0.0
  %v170 = vmax.f32 %v160, 0.0
  %v171 = vmax.f32 %v162, 0.0
  %v172 = vld [vmem:[%s3] sm:$0xff]
  %v173 = vld [vmem:[%s3 + $0x8] sm:$0xff]
  %v174 = vld [vmem:[%s3 + $0x10] sm:$0xff]
  %v175 = vld [vmem:[%s3 + $0x18] sm:$0xff]
  %v176 = vld [vmem:[%s4] sm:$0xff]
  %v177 = vld [vmem:[%s4 + $0x8] sm:$0xff]
  %v178 = vld [vmem:[%s4 + $0x10] sm:$0xff]
  %v179 = vld [vmem:[%s4 + $0x18] sm:$0xff]
  %181 = vset.pattern.permute.xlu0 0
  %182 = vperm.xlu0 %181, %v176
  %v183 = vpop.permute.xlu0 %182
  %186 = vset.pattern.permute.xlu0 0
  %187 = vperm.xlu0 %186, %v177
  %v188 = vpop.permute.xlu0 %187
  %191 = vset.pattern.permute.xlu0 0
  %192 = vperm.xlu0 %191, %v178
  %v193 = vpop.permute.xlu0 %192
  %196 = vset.pattern.permute.xlu0 0
  %197 = vperm.xlu0 %196, %v179
  %v198 = vpop.permute.xlu0 %197
  %vm200 = vcmask 261120
  %v202 = vsel %vm200, %v172, 0
  %v205 = vsel %vm200, %v173, 0
  %v208 = vsel %vm200, %v174, 0
  %v211 = vsel %vm200, %v175, 0
  %213 = vmatprep.subr.mxu0 %v165
  %214 = vmatpush1.msra.mxu0 %v164
  %215 = vmatprep.subr.mxu0 %v167
  %216 = vmatpush1.msra.mxu0 %v166
  %217 = vmatprep.subr.mxu0 %v169
  %218 = vmatpush1.msra.mxu0 %v168
  %219 = vmatprep.subr.mxu0 %v171
  %220 = vmatpush1.msra.mxu0 %v170
  %221 = vmatprep.subr.mxu0 0.0
  %222 = vmatpush1.msra.mxu0 0.0
  %223 = vmatprep.subr.mxu0 0.0
  %224 = vmatpush1.msra.mxu0 0.0
  %225 = vmatprep.subr.mxu0 0.0
  %226 = vmatpush1.msra.mxu0 0.0
  %227 = vmatprep.subr.mxu0 0.0
  %228 = vmatpush1.msra.mxu0 0.0
  %229 = vmatprep.subr.mxu0 0.0
  %230 = vmatpush1.msra.mxu0 0.0
  %231 = vmatprep.subr.mxu0 0.0
  %232 = vmatpush1.msra.mxu0 0.0
  %233 = vmatprep.subr.mxu0 0.0
  %234 = vmatpush1.msra.mxu0 0.0
  %235 = vmatprep.subr.mxu0 0.0
  %236 = vmatpush1.msra.mxu0 0.0
  %237 = vmatprep.subr.mxu0 0.0
  %238 = vmatpush1.msra.mxu0 0.0
  %239 = vmatprep.subr.mxu0 0.0
  %240 = vmatpush1.msra.mxu0 0.0
  %241 = vmatprep.subr.mxu0 0.0
  %242 = vmatpush1.msra.mxu0 0.0
  %243 = vmatprep.subr.mxu0 0.0
  %244 = vmatpush1.msra.mxu0 0.0
  %245 = vmatprep.subr.mxu0 0.0
  %246 = vmatpush1.msra.mxu0 0.0
  %247 = vmatprep.subr.mxu0 0.0
  %248 = vmatpush1.msra.mxu0 0.0
  %249 = vmatprep.subr.mxu0 0.0
  %250 = vmatpush1.msra.mxu0 0.0
  %251 = vmatprep.subr.mxu0 0.0
  %252 = vmatpush1.msra.mxu0 0.0
  %253 = vmatprep.subr.mxu0 0.0
  %254 = vmatpush1.msra.mxu0 0.0
  %255 = vmatprep.subr.mxu0 0.0
  %256 = vmatpush1.msra.mxu0 0.0
  %257 = vmatprep.subr.mxu0 0.0
  %258 = vmatpush1.msra.mxu0 0.0
  %259 = vmatprep.subr.mxu0 0.0
  %260 = vmatpush1.msra.mxu0 0.0
  %261 = vmatprep.subr.mxu0 0.0
  %262 = vmatpush1.msra.mxu0 0.0
  %263 = vmatprep.subr.mxu0 0.0
  %264 = vmatpush1.msra.mxu0 0.0
  %265 = vmatprep.subr.mxu0 0.0
  %266 = vmatpush1.msra.mxu0 0.0
  %267 = vmatprep.subr.mxu0 0.0
  %268 = vmatpush1.msra.mxu0 0.0
  %269 = vmatprep.subr.mxu0 0.0
  %270 = vmatpush1.msra.mxu0 0.0
  %271 = vmatprep.subr.mxu0 0.0
  %272 = vmatpush1.msra.mxu0 0.0
  %273 = vmatprep.subr.mxu0 0.0
  %274 = vmatpush1.msra.mxu0 0.0
  %275 = vmatprep.subr.mxu0 0.0
  %276 = vmatpush1.msra.mxu0 0.0
  %277 = vmatprep.mubr.f32.mxu0 0.0
  %278 = vmatmul.mubr.f32.gmra.mrb[0].mxu0 %v202
  %v279 = vpop.f32.mrb[0].mxu0
  %v280 = vadd.f32 %v183, %v279
  %v281 = vpop.f32.mrb[0].mxu0
  %v282 = vadd.f32 %v183, %v281
  %283 = vmatprep.mubr.f32.mxu0 0.0
  %284 = vmatmul.mubr.f32.gmra.mrb[0].mxu0 %v205
  %v285 = vpop.f32.mrb[0].mxu0
  %v286 = vadd.f32 %v188, %v285
  %v287 = vpop.f32.mrb[0].mxu0
  %v288 = vadd.f32 %v188, %v287
  %289 = vmatprep.mubr.f32.mxu0 0.0
  %290 = vmatmul.mubr.f32.gmra.mrb[0].mxu0 %v208
  %v291 = vpop.f32.mrb[0].mxu0
  %v292 = vadd.f32 %v193, %v291
  %v293 = vpop.f32.mrb[0].mxu0
  %v294 = vadd.f32 %v193, %v293
  %295 = vmatprep.mubr.f32.mxu0 0.0
  %296 = vmatmul.mubr.f32.gmra.mrb[0].mxu0 %v211
  %v297 = vpop.f32.mrb[0].mxu0
  %v298 = vadd.f32 %v198, %v297
  %v299 = vpop.f32.mrb[0].mxu0
  %v300 = vadd.f32 %v198, %v299
  %301 = vdwg.mxu0
  %v302 = vmax.f32 %v280, 0.0
  %v303 = vmax.f32 %v282, 0.0
  %v304 = vmax.f32 %v286, 0.0
  %v305 = vmax.f32 %v288, 0.0
  %v306 = vmax.f32 %v292, 0.0
  %v307 = vmax.f32 %v294, 0.0
  %v308 = vmax.f32 %v298, 0.0
  %v309 = vmax.f32 %v300, 0.0
  %v310 = vld [vmem:[%s5] sm:$0xff]
  %v311 = vld [vmem:[%s6] sm:$0xff]
  %313 = vset.pattern.permute.xlu0 0
  %314 = vperm.xlu0 %313, %v311
  %v315 = vpop.permute.xlu0 %314
  %v318 = vsel %vm200, %v310, 0
  %320 = vmatprep.subr.mxu0 %v303
  %321 = vmatpush1.msra.mxu0 %v302
  %322 = vmatprep.subr.mxu0 %v305
  %323 = vmatpush1.msra.mxu0 %v304
  %324 = vmatprep.subr.mxu0 %v307
  %325 = vmatpush1.msra.mxu0 %v306
  %326 = vmatprep.subr.mxu0 %v309
  %327 = vmatpush1.msra.mxu0 %v308
  %328 = vmatprep.subr.mxu0 0.0
  %329 = vmatpush1.msra.mxu0 0.0
  %330 = vmatprep.subr.mxu0 0.0
  %331 = vmatpush1.msra.mxu0 0.0
  %332 = vmatprep.subr.mxu0 0.0
  %333 = vmatpush1.msra.mxu0 0.0
  %334 = vmatprep.subr.mxu0 0.0
  %335 = vmatpush1.msra.mxu0 0.0
  %336 = vmatprep.subr.mxu0 0.0
  %337 = vmatpush1.msra.mxu0 0.0
  %338 = vmatprep.subr.mxu0 0.0
  %339 = vmatpush1.msra.mxu0 0.0
  %340 = vmatprep.subr.mxu0 0.0
  %341 = vmatpush1.msra.mxu0 0.0
  %342 = vmatprep.subr.mxu0 0.0
  %343 = vmatpush1.msra.mxu0 0.0
  %344 = vmatprep.subr.mxu0 0.0
  %345 = vmatpush1.msra.mxu0 0.0
  %346 = vmatprep.subr.mxu0 0.0
  %347 = vmatpush1.msra.mxu0 0.0
  %348 = vmatprep.subr.mxu0 0.0
  %349 = vmatpush1.msra.mxu0 0.0
  %350 = vmatprep.subr.mxu0 0.0
  %351 = vmatpush1.msra.mxu0 0.0
  %352 = vmatprep.subr.mxu0 0.0
  %353 = vmatpush1.msra.mxu0 0.0
  %354 = vmatprep.subr.mxu0 0.0
  %355 = vmatpush1.msra.mxu0 0.0
  %356 = vmatprep.subr.mxu0 0.0
  %357 = vmatpush1.msra.mxu0 0.0
  %358 = vmatprep.subr.mxu0 0.0
  %359 = vmatpush1.msra.mxu0 0.0
  %360 = vmatprep.subr.mxu0 0.0
  %361 = vmatpush1.msra.mxu0 0.0
  %362 = vmatprep.subr.mxu0 0.0
  %363 = vmatpush1.msra.mxu0 0.0
  %364 = vmatprep.subr.mxu0 0.0
  %365 = vmatpush1.msra.mxu0 0.0
  %366 = vmatprep.subr.mxu0 0.0
  %367 = vmatpush1.msra.mxu0 0.0
  %368 = vmatprep.subr.mxu0 0.0
  %369 = vmatpush1.msra.mxu0 0.0
  %370 = vmatprep.subr.mxu0 0.0
  %371 = vmatpush1.msra.mxu0 0.0
  %372 = vmatprep.subr.mxu0 0.0
  %373 = vmatpush1.msra.mxu0 0.0
  %374 = vmatprep.subr.mxu0 0.0
  %375 = vmatpush1.msra.mxu0 0.0
  %376 = vmatprep.subr.mxu0 0.0
  %377 = vmatpush1.msra.mxu0 0.0
  %378 = vmatprep.subr.mxu0 0.0
  %379 = vmatpush1.msra.mxu0 0.0
  %380 = vmatprep.subr.mxu0 0.0
  %381 = vmatpush1.msra.mxu0 0.0
  %382 = vmatprep.subr.mxu0 0.0
  %383 = vmatpush1.msra.mxu0 0.0
  %384 = vmatprep.mubr.f32.mxu0 0.0
  %385 = vmatmul.mubr.f32.gmra.mrb[0].mxu0 %v318
  %v386 = vpop.f32.mrb[0].mxu0
  %v387 = vadd.f32 %v315, %v386
  %v388 = vpop.f32.mrb[0].mxu0
  %v389 = vadd.f32 %v315, %v388
  %390 = vdwg.mxu0
  %391 = vst [vmem:[%s7] sm:$0xff] %v387
  %392 = vst [vmem:[%s7 + $0x8] sm:$0xff] %v389
  // Predicated region
  $region30: #{discriminator_forward.1} parent=0 // pred_check
    _
  $region31: #{discriminator_forward.1} parent=0 // pred_check_branch
    %394 = sbr.rel (0) target = $region33
  $region32: #{discriminator_forward.1} parent=0 // pred_region
    _
  $region33: #{discriminator_forward.1} parent=0 // pred_fallthru
    _
  // Predicated region
  $region34: #{discriminator_forward.1} parent=0 // pred_check
    _
  $region35: #{discriminator_forward.1} parent=0 // pred_check_branch
    %396 = sbr.rel (0) target = $region37
  $region36: #{discriminator_forward.1} parent=0 // pred_region
    _
  $region37: #{discriminator_forward.1} parent=0 // pred_fallthru
    _

</llo_original>
